<compile_context>
chip_gen: v7x
topology: tpu7x:2x2x1
jax: 0.10.0
libtpu: 0.0.40
codegen_flags: <defaults>
</compile_context>

<pallas_src>
import jax
import jax.numpy as jnp
from jax.experimental import pallas as pl
from jax.experimental.pallas import tpu as pltpu

LANE = 128
SUBLANE = 8
TILE = LANE * SUBLANE  # 1024 elements = one full (8,128) f32 tile


def _round_up(n, m):
    return ((n + m - 1) // m) * m


def _max_block_rows():
    # 3 operands x 2 pipeline buffers x (block_rows*128*4B):
    #   8192 rows -> 24 MiB  (fits v6e/v7x 32 MiB default scoped VMEM)
    #   4096 rows -> 12 MiB  (fits v5e 16 MiB default scoped VMEM)
    try:
        kind = jax.devices()[0].device_kind.lower()
    except Exception:
        return 4096
    if "v5 lite" in kind or "v5e" in kind or "v5litepod" in kind:
        return 4096
    return 8192


MAX_BLOCK_ROWS = _max_block_rows()
# Aim for >= 4 grid steps so the "parallel" grid axis can be sharded across
# both v7x TensorCores (harmless on single-TC v5e/v6e).
MIN_GRID_STEPS = 4


def _choose_block_rows(rows):
    steps = max(MIN_GRID_STEPS, pl.cdiv(rows, MAX_BLOCK_ROWS))
    block_rows = _round_up(pl.cdiv(rows, steps), SUBLANE)
    block_rows = max(SUBLANE, min(block_rows, MAX_BLOCK_ROWS, rows))
    return block_rows


# ---------------------------------------------------------------------------
# Pallas kernel: elementwise EMA update on one (block_rows, 128) block.
# Mem-bound stream: 3 VALU ops + one cast per vreg; nothing else to optimize
# in the body (keep last dim = 128 for unmasked vst, upcast inside kernel).
# ---------------------------------------------------------------------------
def _ema_kernel(shadow_ref, param_ref, omd_ref, out_ref):
    omd = omd_ref[0]                         # f32[1] scalar in SMEM
    s = shadow_ref[...]                      # f32
    p = param_ref[...].astype(jnp.float32)   # native dtype -> f32 in-kernel
    # shadow.sub_(one_minus_decay * (shadow - param))
    out_ref[...] = s - omd * (s - p)


def ema_update_2d(shadow_2d, param_2d, omd):
    """In-place EMA update of a lane-dense f32 (rows, 128) shadow slab."""
    rows, cols = shadow_2d.shape
    assert cols == LANE and rows % SUBLANE == 0
    block_rows = _choose_block_rows(rows)
    grid = (pl.cdiv(rows, block_rows),)      # last block may be partial
    return pl.pallas_call(
        _ema_kernel,
        out_shape=jax.ShapeDtypeStruct((rows, cols), shadow_2d.dtype),
        grid=grid,
        in_specs=[
            pl.BlockSpec((block_rows, cols), lambda i: (i, 0)),   # shadow (aliased)
            pl.BlockSpec((block_rows, cols), lambda i: (i, 0)),   # params (native dtype)
            pl.BlockSpec(memory_space=pltpu.MemorySpace.SMEM),    # one_minus_decay
        ],
        out_specs=pl.BlockSpec((block_rows, cols), lambda i: (i, 0)),
        input_output_aliases={0: 0},   # P8: in-place update of shadow slab
        compiler_params=pltpu.CompilerParams(
            dimension_semantics=("parallel",)),
    )(shadow_2d, param_2d, omd)


def _pack_leaves(leaves, rows, dtype):
    flat = jnp.concatenate([jnp.ravel(x).astype(dtype) for x in leaves])
    pad = rows * LANE - flat.shape[0]
    if pad:
        flat = jnp.pad(flat, (0, pad))
    return flat.reshape(rows, LANE)


# ---------------------------------------------------------------------------
# LitEma equivalent.
# ---------------------------------------------------------------------------
class LitEmaJax:
    """JAX/Pallas port of LitEma.

    Shadow state: one f32 (rows,128) slab per "direct" leaf (size % 1024 == 0)
    plus one tiny packed slab per param dtype for the remaining small leaves.
    """

    def __init__(self, params, decay=0.9999, use_num_updates=True):
        if decay < 0.0 or decay > 1.0:
            raise ValueError('Decay must be between 0 and 1')
        self.decay = float(decay)
        self.use_num_updates = bool(use_num_updates)
        self.num_updates = jnp.int32(0) if use_num_updates else jnp.int32(-1)

        leaves, treedef = jax.tree_util.tree_flatten(params)
        leaves = [jnp.asarray(x) for x in leaves]
        self._treedef = treedef
        self._shapes = [x.shape for x in leaves]
        self._dtypes = [x.dtype for x in leaves]
        self._sizes = [int(x.size) for x in leaves]
        n = len(leaves)

        # PyTorch LitEma only tracks requires_grad float parameters ->
        # filter non-float leaves; they pass through untouched.
        is_float = [jnp.issubdtype(dt, jnp.floating) for dt in self._dtypes]

        # Direct leaves: reshapeable to a full lane-dense (8k,128) view ->
        # EMA'd straight from the incoming param array (zero repack traffic).
        self._direct_idx = [i for i in range(n)
                            if is_float[i] and self._sizes[i] > 0
                            and self._sizes[i] % TILE == 0]
        direct_set = set(self._direct_idx)

        # Tail leaves: small/ragged float leaves, packed once per dtype.
        tail_dtypes, tail_idx_groups = [], []
        for i in range(n):
            if is_float[i] and i not in direct_set:
                dt = leaves[i].dtype
                if dt not in tail_dtypes:
                    tail_dtypes.append(dt)
                    tail_idx_groups.append([])
                tail_idx_groups[tail_dtypes.index(dt)].append(i)
        self._tail_dtypes = tail_dtypes
        self._tail_idx_groups = tail_idx_groups

        self._frozen_idx = [i for i in range(n) if not is_float[i]]
        self._frozen = {i: leaves[i] for i in self._frozen_idx}

        # Shadow state (always f32: 1-decay=1e-4 underflows bf16 accumulation).
        self._shadow_direct = [
            jnp.ravel(leaves[i]).astype(jnp.float32).reshape(-1, LANE)
            for i in self._direct_idx]
        self._tail_rows = []
        self._shadow_tails = []
        for idxs in tail_idx_groups:
            total = sum(self._sizes[i] for i in idxs)
            rows = max(SUBLANE, _round_up(pl.cdiv(total, LANE), SUBLANE))
            self._tail_rows.append(rows)
            self._shadow_tails.append(
                _pack_leaves([leaves[i] for i in idxs], rows, jnp.float32))

        self.collected_params = None

        decay_f = self.decay
        use_nu = self.use_num_updates
        direct_idx = list(self._direct_idx)
        tail_rows = list(self._tail_rows)
        tail_groups = [list(g) for g in tail_idx_groups]
        tail_dts = list(tail_dtypes)

        def _step(shadow_direct, shadow_tails, num_updates, param_leaves):
            if use_nu:
                new_nu = num_updates + jnp.int32(1)
                nu_f = new_nu.astype(jnp.float32)
                d = jnp.minimum(jnp.float32(decay_f),
                                (1.0 + nu_f) / (10.0 + nu_f))
            else:
                new_nu = num_updates
                d = jnp.float32(decay_f)
            omd = jnp.reshape(jnp.float32(1.0) - d, (1,))

            # Direct leaves: lane-dense view of the incoming param, no repack.
            new_direct = []
            for slab, li in zip(shadow_direct, direct_idx):
                p2d = jnp.reshape(param_leaves[li], (-1, LANE))
                new_direct.append(ema_update_2d(slab, p2d, omd))

            # Tail leaves: tiny per-dtype packed slabs (negligible traffic).
            new_tails = []
            for slab, idxs, rows, dt in zip(shadow_tails, tail_groups,
                                            tail_rows, tail_dts):
                p_slab = _pack_leaves([param_leaves[i] for i in idxs], rows, dt)
                new_tails.append(ema_update_2d(slab, p_slab, omd))
            return new_direct, new_tails, new_nu

        # Donate shadow state so the aliased pallas outputs reuse its HBM.
        self._step = jax.jit(_step, donate_argnums=(0, 1))

    def __call__(self, params):
        leaves, treedef = jax.tree_util.tree_flatten(params)
        if treedef != self._treedef:
            raise ValueError("param tree structure does not match EMA buffers")
        self._shadow_direct, self._shadow_tails, self.num_updates = self._step(
            self._shadow_direct, self._shadow_tails, self.num_updates,
            list(leaves))
        # PyTorch forward returns None; shadow state is updated in place.

    def copy_to(self):
        """Unpack the shadow state back into the original pytree (eval use)."""
        out = [None] * len(self._shapes)
        for slab, li in zip(self._shadow_direct, self._direct_idx):
            out[li] = slab.reshape(self._shapes[li]).astype(self._dtypes[li])
        for slab, idxs in zip(self._shadow_tails, self._tail_idx_groups):
            flat = slab.reshape(-1)
            off = 0
            for i in idxs:
                sz = self._sizes[i]
                out[i] = flat[off:off + sz].reshape(self._shapes[i]) \
                                           .astype(self._dtypes[i])
                off += sz
        for i in self._frozen_idx:
            out[i] = self._frozen[i]
        return jax.tree_util.tree_unflatten(self._treedef, out)

    def store(self, parameters):
        # TODO(synk): store/restore are host-side bookkeeping (no kernel work).
        self.collected_params = jax.tree_util.tree_map(jnp.array, parameters)

    def restore(self):
        return self.collected_params


# ---------------------------------------------------------------------------
# Demo / self-check.
# ---------------------------------------------------------------------------
if __name__ == "__main__":
    key = jax.random.PRNGKey(0)
    ks = jax.random.split(key, 8)

    # Synthetic "model" parameters exercising every path:
    #   embed_weight / proj_weight : direct (lane-dense) path, f32 and bf16
    #   conv/fc/norm leaves        : per-dtype tail-slab path
    #   position_ids               : non-float buffer, not EMA'd
    model_params = {
        "embed_weight": jax.random.normal(ks[0], (64, 128), dtype=jnp.float32) * 0.1,
        "proj_weight":  (jax.random.normal(ks[1], (16, 128), dtype=jnp.float32)
                         * 0.1).astype(jnp.bfloat16),
        "conv_weight":  jax.random.normal(ks[2], (4, 4, 3, 3), dtype=jnp.float32) * 0.1,
        "conv_bias":    jax.random.normal(ks[3], (4,), dtype=jnp.float32) * 0.1,
        "fc_weight":    jax.random.normal(ks[4], (32, 16), dtype=jnp.float32) * 0.1,
        "fc_bias":      jax.random.normal(ks[5], (32,), dtype=jnp.float32) * 0.1,
        "norm_scale":   jnp.ones((48,), dtype=jnp.bfloat16),
        "position_ids": jnp.arange(8, dtype=jnp.int32),
    }

    ema = LitEmaJax(model_params, decay=0.9999, use_num_updates=True)

    def perturb(params, step):
        out = {}
        for i, (name, p) in enumerate(sorted(params.items())):
            if jnp.issubdtype(p.dtype, jnp.floating):
                k = jax.random.fold_in(ks[6], step * 100 + i)
                noise = 0.05 * jax.random.normal(k, p.shape, jnp.float32)
                out[name] = (p.astype(jnp.float32) + noise).astype(p.dtype)
            else:
                out[name] = p
        return out

    params_step1 = perturb(model_params, 1)
    params_step2 = perturb(model_params, 2)

    # Two simulated training steps.
    ema(params_step1)
    ema(params_step2)
    shadow = ema.copy_to()
    jax.block_until_ready(jax.tree_util.tree_leaves(shadow))

    # Pure-JAX f32 reference with identical semantics.
    ref = {k: jnp.asarray(v, jnp.float32) for k, v in model_params.items()
           if jnp.issubdtype(model_params[k].dtype, jnp.floating)}
    for step, p_t in enumerate([params_step1, params_step2], start=1):
        decay = min(0.9999, (1.0 + step) / (10.0 + step))
        omd = jnp.float32(1.0 - decay)
        ref = {k: ref[k] - omd * (ref[k] - p_t[k].astype(jnp.float32))
               for k in ref}

    for name, p0 in model_params.items():
        assert shadow[name].shape == p0.shape, name
        assert shadow[name].dtype == p0.dtype, name
        if jnp.issubdtype(p0.dtype, jnp.floating):
            tol = 1e-6 if p0.dtype == jnp.float32 else 1e-2
            assert jnp.allclose(shadow[name].astype(jnp.float32), ref[name],
                                atol=tol, rtol=tol), name
        else:
            assert jnp.array_equal(shadow[name], p0), name
    assert int(ema.num_updates) == 2

    print("KERNEL_OK")
</pallas_src>

<mosaic_0001>
module attributes {stable_mosaic.version = 11 : i64} {
  func.func @_ema_kernel(%arg0: i32, %arg1: memref<8x128xf32, #tpu.memory_space<vmem>>, %arg2: memref<8x128xf32, #tpu.memory_space<vmem>>, %arg3: memref<1xf32, #tpu.memory_space<smem>>, %arg4: memref<8x128xf32, #tpu.memory_space<vmem>>) attributes {dimension_semantics = [#tpu.dimension_semantics<parallel>], iteration_bounds = array<i64: 1>, scalar_prefetch = 0 : i64, scratch_operands = 0 : i64, tpu.core_type = #tpu.core_type<tc>, window_params = [{transform_indices = @transform_0, window_bounds = array<i64: 8, 128>}, {transform_indices = @transform_1, window_bounds = array<i64: 8, 128>}, {transform_indices = @transform_2, window_bounds = array<i64: 1>}, {transform_indices = @transform_3, window_bounds = array<i64: 8, 128>}]} {
    %c0 = arith.constant 0 : index
    %0 = memref.load %arg3[%c0] : memref<1xf32, #tpu.memory_space<smem>>
    %c0_0 = arith.constant 0 : index
    %c0_1 = arith.constant 0 : index
    %1 = vector.load %arg1[%c0_0, %c0_1] : memref<8x128xf32, #tpu.memory_space<vmem>>, vector<8x128xf32>
    %c0_2 = arith.constant 0 : index
    %c0_3 = arith.constant 0 : index
    %2 = vector.load %arg2[%c0_2, %c0_3] : memref<8x128xf32, #tpu.memory_space<vmem>>, vector<8x128xf32>
    %3 = arith.subf %1, %2 : vector<8x128xf32>
    %4 = vector.broadcast %0 : f32 to vector<8x128xf32>
    %5 = arith.mulf %4, %3 : vector<8x128xf32>
    %6 = arith.subf %1, %5 : vector<8x128xf32>
    %c0_4 = arith.constant 0 : index
    %c0_5 = arith.constant 0 : index
    %7 = vector.load %arg4[%c0_4, %c0_5] : memref<8x128xf32, #tpu.memory_space<vmem>>, vector<8x128xf32>
    tpu.vector_store %arg4[%c0_4, %c0_5], %6 {strides = array<i32>} : memref<8x128xf32, #tpu.memory_space<vmem>>, vector<8x128xf32>,
    return
  }
  func.func @transform_0(%arg0: i32) -> (i32, i32) {
    %c0_i32 = arith.constant 0 : i32
    %c0_i32_0 = arith.constant 0 : i32
    return %arg0, %c0_i32 : i32, i32
  }
  func.func @transform_1(%arg0: i32) -> (i32, i32) {
    %c0_i32 = arith.constant 0 : i32
    %c0_i32_0 = arith.constant 0 : i32
    return %arg0, %c0_i32 : i32, i32
  }
  func.func @transform_2(%arg0: i32) -> i32 {
    %c0_i32 = arith.constant 0 : i32
    %c0_i32_0 = arith.constant 0 : i32
    return %c0_i32 : i32
  }
  func.func @transform_3(%arg0: i32) -> (i32, i32) {
    %c0_i32 = arith.constant 0 : i32
    %c0_i32_0 = arith.constant 0 : i32
    return %arg0, %c0_i32 : i32, i32
  }
}

module attributes {stable_mosaic.version = 11 : i64} {
  func.func @_ema_kernel(%arg0: i32, %arg1: memref<8x128xf32, #tpu.memory_space<vmem>>, %arg2: memref<8x128xbf16, #tpu.memory_space<vmem>>, %arg3: memref<1xf32, #tpu.memory_space<smem>>, %arg4: memref<8x128xf32, #tpu.memory_space<vmem>>) attributes {dimension_semantics = [#tpu.dimension_semantics<parallel>], iteration_bounds = array<i64: 1>, scalar_prefetch = 0 : i64, scratch_operands = 0 : i64, tpu.core_type = #tpu.core_type<tc>, window_params = [{transform_indices = @transform_0, window_bounds = array<i64: 8, 128>}, {transform_indices = @transform_1, window_bounds = array<i64: 8, 128>}, {transform_indices = @transform_2, window_bounds = array<i64: 1>}, {transform_indices = @transform_3, window_bounds = array<i64: 8, 128>}]} {
    %c0 = arith.constant 0 : index
    %0 = memref.load %arg3[%c0] : memref<1xf32, #tpu.memory_space<smem>>
    %c0_0 = arith.constant 0 : index
    %c0_1 = arith.constant 0 : index
    %1 = vector.load %arg1[%c0_0, %c0_1] : memref<8x128xf32, #tpu.memory_space<vmem>>, vector<8x128xf32>
    %c0_2 = arith.constant 0 : index
    %c0_3 = arith.constant 0 : index
    %2 = vector.load %arg2[%c0_2, %c0_3] : memref<8x128xbf16, #tpu.memory_space<vmem>>, vector<8x128xbf16>
    %3 = arith.extf %2 : vector<8x128xbf16> to vector<8x128xf32>
    %4 = arith.subf %1, %3 : vector<8x128xf32>
    %5 = vector.broadcast %0 : f32 to vector<8x128xf32>
    %6 = arith.mulf %5, %4 : vector<8x128xf32>
    %7 = arith.subf %1, %6 : vector<8x128xf32>
    %c0_4 = arith.constant 0 : index
    %c0_5 = arith.constant 0 : index
    %8 = vector.load %arg4[%c0_4, %c0_5] : memref<8x128xf32, #tpu.memory_space<vmem>>, vector<8x128xf32>
    tpu.vector_store %arg4[%c0_4, %c0_5], %7 {strides = array<i32>} : memref<8x128xf32, #tpu.memory_space<vmem>>, vector<8x128xf32>,
    return
  }
  func.func @transform_0(%arg0: i32) -> (i32, i32) {
    %c0_i32 = arith.constant 0 : i32
    %c0_i32_0 = arith.constant 0 : i32
    return %arg0, %c0_i32 : i32, i32
  }
  func.func @transform_1(%arg0: i32) -> (i32, i32) {
    %c0_i32 = arith.constant 0 : i32
    %c0_i32_0 = arith.constant 0 : i32
    return %arg0, %c0_i32 : i32, i32
  }
  func.func @transform_2(%arg0: i32) -> i32 {
    %c0_i32 = arith.constant 0 : i32
    %c0_i32_0 = arith.constant 0 : i32
    return %c0_i32 : i32
  }
  func.func @transform_3(%arg0: i32) -> (i32, i32) {
    %c0_i32 = arith.constant 0 : i32
    %c0_i32_0 = arith.constant 0 : i32
    return %arg0, %c0_i32 : i32, i32
  }
}

module attributes {stable_mosaic.version = 11 : i64} {
  func.func @_ema_kernel(%arg0: i32, %arg1: memref<8x128xf32, #tpu.memory_space<vmem>>, %arg2: memref<8x128xbf16, #tpu.memory_space<vmem>>, %arg3: memref<1xf32, #tpu.memory_space<smem>>, %arg4: memref<8x128xf32, #tpu.memory_space<vmem>>) attributes {dimension_semantics = [#tpu.dimension_semantics<parallel>], iteration_bounds = array<i64: 2>, scalar_prefetch = 0 : i64, scratch_operands = 0 : i64, tpu.core_type = #tpu.core_type<tc>, window_params = [{transform_indices = @transform_0, window_bounds = array<i64: 8, 128>}, {transform_indices = @transform_1, window_bounds = array<i64: 8, 128>}, {transform_indices = @transform_2, window_bounds = array<i64: 1>}, {transform_indices = @transform_3, window_bounds = array<i64: 8, 128>}]} {
    %c0 = arith.constant 0 : index
    %0 = memref.load %arg3[%c0] : memref<1xf32, #tpu.memory_space<smem>>
    %c0_0 = arith.constant 0 : index
    %c0_1 = arith.constant 0 : index
    %1 = vector.load %arg1[%c0_0, %c0_1] : memref<8x128xf32, #tpu.memory_space<vmem>>, vector<8x128xf32>
    %c0_2 = arith.constant 0 : index
    %c0_3 = arith.constant 0 : index
    %2 = vector.load %arg2[%c0_2, %c0_3] : memref<8x128xbf16, #tpu.memory_space<vmem>>, vector<8x128xbf16>
    %3 = arith.extf %2 : vector<8x128xbf16> to vector<8x128xf32>
    %4 = arith.subf %1, %3 : vector<8x128xf32>
    %5 = vector.broadcast %0 : f32 to vector<8x128xf32>
    %6 = arith.mulf %5, %4 : vector<8x128xf32>
    %7 = arith.subf %1, %6 : vector<8x128xf32>
    %c0_4 = arith.constant 0 : index
    %c0_5 = arith.constant 0 : index
    %8 = vector.load %arg4[%c0_4, %c0_5] : memref<8x128xf32, #tpu.memory_space<vmem>>, vector<8x128xf32>
    tpu.vector_store %arg4[%c0_4, %c0_5], %7 {strides = array<i32>} : memref<8x128xf32, #tpu.memory_space<vmem>>, vector<8x128xf32>,
    return
  }
  func.func @transform_0(%arg0: i32) -> (i32, i32) {
    %c0_i32 = arith.constant 0 : i32
    %c0_i32_0 = arith.constant 0 : i32
    return %arg0, %c0_i32 : i32, i32
  }
  func.func @transform_1(%arg0: i32) -> (i32, i32) {
    %c0_i32 = arith.constant 0 : i32
    %c0_i32_0 = arith.constant 0 : i32
    return %arg0, %c0_i32 : i32, i32
  }
  func.func @transform_2(%arg0: i32) -> i32 {
    %c0_i32 = arith.constant 0 : i32
    %c0_i32_0 = arith.constant 0 : i32
    return %c0_i32 : i32
  }
  func.func @transform_3(%arg0: i32) -> (i32, i32) {
    %c0_i32 = arith.constant 0 : i32
    %c0_i32_0 = arith.constant 0 : i32
    return %arg0, %c0_i32 : i32, i32
  }
}

module attributes {stable_mosaic.version = 11 : i64} {
  func.func @_ema_kernel(%arg0: i32, %arg1: memref<16x128xf32, #tpu.memory_space<vmem>>, %arg2: memref<16x128xf32, #tpu.memory_space<vmem>>, %arg3: memref<1xf32, #tpu.memory_space<smem>>, %arg4: memref<16x128xf32, #tpu.memory_space<vmem>>) attributes {dimension_semantics = [#tpu.dimension_semantics<parallel>], iteration_bounds = array<i64: 4>, scalar_prefetch = 0 : i64, scratch_operands = 0 : i64, tpu.core_type = #tpu.core_type<tc>, window_params = [{transform_indices = @transform_0, window_bounds = array<i64: 16, 128>}, {transform_indices = @transform_1, window_bounds = array<i64: 16, 128>}, {transform_indices = @transform_2, window_bounds = array<i64: 1>}, {transform_indices = @transform_3, window_bounds = array<i64: 16, 128>}]} {
    %c0 = arith.constant 0 : index
    %0 = memref.load %arg3[%c0] : memref<1xf32, #tpu.memory_space<smem>>
    %c0_0 = arith.constant 0 : index
    %c0_1 = arith.constant 0 : index
    %1 = vector.load %arg1[%c0_0, %c0_1] : memref<16x128xf32, #tpu.memory_space<vmem>>, vector<16x128xf32>
    %c0_2 = arith.constant 0 : index
    %c0_3 = arith.constant 0 : index
    %2 = vector.load %arg2[%c0_2, %c0_3] : memref<16x128xf32, #tpu.memory_space<vmem>>, vector<16x128xf32>
    %3 = arith.subf %1, %2 : vector<16x128xf32>
    %4 = vector.broadcast %0 : f32 to vector<16x128xf32>
    %5 = arith.mulf %4, %3 : vector<16x128xf32>
    %6 = arith.subf %1, %5 : vector<16x128xf32>
    %c0_4 = arith.constant 0 : index
    %c0_5 = arith.constant 0 : index
    %7 = vector.load %arg4[%c0_4, %c0_5] : memref<16x128xf32, #tpu.memory_space<vmem>>, vector<16x128xf32>
    tpu.vector_store %arg4[%c0_4, %c0_5], %6 {strides = array<i32>} : memref<16x128xf32, #tpu.memory_space<vmem>>, vector<16x128xf32>,
    return
  }
  func.func @transform_0(%arg0: i32) -> (i32, i32) {
    %c0_i32 = arith.constant 0 : i32
    %c0_i32_0 = arith.constant 0 : i32
    return %arg0, %c0_i32 : i32, i32
  }
  func.func @transform_1(%arg0: i32) -> (i32, i32) {
    %c0_i32 = arith.constant 0 : i32
    %c0_i32_0 = arith.constant 0 : i32
    return %arg0, %c0_i32 : i32, i32
  }
  func.func @transform_2(%arg0: i32) -> i32 {
    %c0_i32 = arith.constant 0 : i32
    %c0_i32_0 = arith.constant 0 : i32
    return %c0_i32 : i32
  }
  func.func @transform_3(%arg0: i32) -> (i32, i32) {
    %c0_i32 = arith.constant 0 : i32
    %c0_i32_0 = arith.constant 0 : i32
    return %arg0, %c0_i32 : i32, i32
  }
}

</mosaic_0001>

<llo_original>
// kernel: _step.7
$region0: #{_step.7}
  #allocation0 [shape = 'u32[]', space=smem, size = 0x4, offset = 0x4, fixed_abs, tag = 'smem constant byte address 0x4 - core index']
  #allocation1 [shape = 'u32[144,128]{1,0:T(1,128)}', space=vmem, size = 0x12000, scoped, tag = 'internal scratch']
  #allocation2 [shape = 'f32[1]{0:T(128)S(6)}', space=smem, size = 0x200, scoped, tag = 'scoped memory for _step.7']
  %s0 = inlined_call_operand.vmem [shape: f32[8,128], index: 0, kind: input, shape index: {}, may-alias: {0,3}]
  %s1 = inlined_call_operand.vmem [shape: bf16[8,128], index: 1, kind: input, shape index: {}]
  %s2 = inlined_call_operand.<no memory space> [shape: f32[1], index: 2, kind: input, shape index: {}]
  %s3 = inlined_call_operand.vmem [shape: f32[8,128], index: 3, kind: output, shape index: {}, may-alias: {0,3}]
  %s4 = sld [smem:[#allocation0]]
  $region22: #{_step.7} parent=0
    _
  %s6 = ssub.s32 1, %s4
  %s7 = scalar_select 0, %s6, %s4
  %8 = sst [smem:[#allocation2]] %s2
  // Predicated region
  $region2: #{_step.7} parent=0 // pred_check
    _
  $region3: #{_step.7} parent=0 // pred_check_branch
    %10 = sbr.rel (0) target = $region5
  $region4: #{_step.7} parent=0 // pred_region
    _
  $region5: #{_step.7} parent=0 // pred_fallthru
    _
  // Predicated region
  $region6: #{_step.7} parent=0 // pred_check
    _
  $region7: #{_step.7} parent=0 // pred_check_branch
    %12 = sbr.rel (0) target = $region9
  $region8: #{_step.7} parent=0 // pred_region
    _
  $region9: #{_step.7} parent=0 // pred_fallthru
    _
  // Predicated region
  $region10: #{_step.7} parent=0 // pred_check
    _
  $region11: #{_step.7} parent=0 // pred_check_branch
    %14 = sbr.rel (0) target = $region13
  $region12: #{_step.7} parent=0 // pred_region
    _
  $region13: #{_step.7} parent=0 // pred_fallthru
    _
  %s15 = sld [smem:[#allocation2]]
  %v16 = vld [vmem:[%s0] sm:$0xff]
  %v17 = vld [vmem:[%s1] sm:$0xf]
  %v18 = vunpack.c.l.bf16 %v17
  %v19 = vsub.f32 %v16, %v18
  %v20 = vstv %s15
  %v21 = vmul.f32 %v20, %v19
  %v22 = vsub.f32 %v16, %v21
  %23 = vst [vmem:[%s3] sm:$0xff] %v22
  // Predicated region
  $region14: #{_step.7} parent=0 // pred_check
    _
  $region15: #{_step.7} parent=0 // pred_check_branch
    %25 = sbr.rel (0) target = $region17
  $region16: #{_step.7} parent=0 // pred_region
    _
  $region17: #{_step.7} parent=0 // pred_fallthru
    _
  // Predicated region
  $region18: #{_step.7} parent=0 // pred_check
    _
  $region19: #{_step.7} parent=0 // pred_check_branch
    %27 = sbr.rel (0) target = $region21
  $region20: #{_step.7} parent=0 // pred_region
    _
  $region21: #{_step.7} parent=0 // pred_fallthru
    _

// kernel: _step.4
$region0: #{_step.4}
  #allocation0 [shape = 'u32[]', space=smem, size = 0x4, offset = 0x4, fixed_abs, tag = 'smem constant byte address 0x4 - core index']
  #allocation1 [shape = 'u32[144,128]{1,0:T(1,128)}', space=vmem, size = 0x12000, scoped, tag = 'internal scratch']
  #allocation2 [shape = 'f32[1]{0:T(128)S(6)}', space=smem, size = 0x200, scoped, tag = 'scoped memory for _step.4']
  %s0 = inlined_call_operand.vmem [shape: f32[64,128], index: 0, kind: input, shape index: {}, may-alias: {0,3}]
  %s1 = inlined_call_operand.vmem [shape: f32[64,128], index: 1, kind: input, shape index: {}]
  %s2 = inlined_call_operand.<no memory space> [shape: f32[1], index: 2, kind: input, shape index: {}]
  %s3 = inlined_call_operand.vmem [shape: f32[64,128], index: 3, kind: output, shape index: {}, may-alias: {0,3}]
  %s4 = sld [smem:[#allocation0]]
  $region45: #{_step.4} parent=0
    _
  %s6 = ssub.s32 1, %s4
  %s7 = scalar_select 0, %s6, %s4
  %8 = sst [smem:[#allocation2]] %s2
  loop: start=0, step=1, limit=6
  $region2: #{_step.4} parent=0 // loop_pre_header
    _
  $region3: #{_step.4} parent=0 // loop_header
    %s10 = sphi 0, %s14
    %p11 = scmp.ge.s32.totalorder %s10, 6
    %s20 = sphi 0, %s22
    %s23 = sphi 0, %s20
    %s24 = sphi 0, %s23
    %s40 = sphi 0, %s24
    %s46 = sphi 0, %s48
    %s49 = sphi 0, %s46
    %s50 = sphi 0, %s49
    %s66 = sphi 0, %s50
    %s70 = sphi 0, %s70
    %s72 = sphi 0, %s70
    %s73 = sphi 0, %s72
    %s87 = sphi 0, %s73
    %s93 = sphi 0, %s95
    %s96 = sphi 0, %s93
    %s97 = sphi 0, %s96
    %s113 = sphi 0, %s97
  $region4: #{_step.4} parent=0 // loop_header_branch
    %13 = sbr.rel (%p11) target = $region8
  $region5: #{_step.4} parent=0 // loop_body
    %s15 = ssub.s32 %s10, 1
    %s16 = ssub.s32 %s10, 2
    %s17 = sadd.s32 %s10, 1
    %s18 = ssub.s32 %s10, %s17
    %p19 = scmp.eq.s32.totalorder %s18, 0
    %s21 = sadd.s32 %s20, 1
    %s22 = scalar_select %p19, %s20, %s21
    %p25 = pneg %p19
    %p26 = scmp.eq.s32.totalorder %s10, 3
    %p27 = por %p25, %p26
    %p28 = scmp.ne.s32.totalorder %s20, %s23
    %p29 = scmp.eq.s32.totalorder %s10, 0
    %p30 = por %p28, %p29
    %p31 = scmp.ne.s32.totalorder %s20, %s23
    %p32 = scmp.eq.s32.totalorder %s15, 3
    %p33 = por %p31, %p32
    %p34 = scmp.ne.s32.totalorder %s23, %s24
    %p35 = scmp.eq.s32.totalorder %s15, 0
    %p36 = por %p34, %p35
    %p37 = scmp.ne.s32.totalorder %s23, %s24
    %p38 = scmp.eq.s32.totalorder %s16, 3
    %p39 = por %p37, %p38
    %p41 = scmp.ne.s32.totalorder %s24, %s40
    %p42 = scmp.eq.s32.totalorder %s16, 0
    %p43 = por %p41, %p42
    %s44 = ssub.s32 %s10, %s17
    %p45 = scmp.eq.s32.totalorder %s44, 0
    %s47 = sadd.s32 %s46, 1
    %s48 = scalar_select %p45, %s46, %s47
    %p51 = pneg %p45
    %p52 = scmp.eq.s32.totalorder %s10, 3
    %p53 = por %p51, %p52
    %p54 = scmp.ne.s32.totalorder %s46, %s49
    %p55 = scmp.eq.s32.totalorder %s10, 0
    %p56 = por %p54, %p55
    %p57 = scmp.ne.s32.totalorder %s46, %s49
    %p58 = scmp.eq.s32.totalorder %s15, 3
    %p59 = por %p57, %p58
    %p60 = scmp.ne.s32.totalorder %s49, %s50
    %p61 = scmp.eq.s32.totalorder %s15, 0
    %p62 = por %p60, %p61
    %p63 = scmp.ne.s32.totalorder %s49, %s50
    %p64 = scmp.eq.s32.totalorder %s16, 3
    %p65 = por %p63, %p64
    %p67 = scmp.ne.s32.totalorder %s50, %s66
    %p68 = scmp.eq.s32.totalorder %s16, 0
    %p69 = por %p67, %p68
    %s71 = sadd.s32 %s70, 1
    %p74 = scmp.eq.s32.totalorder %s10, 3
    %p75 = scmp.ne.s32.totalorder %s70, %s72
    %p76 = scmp.eq.s32.totalorder %s10, 0
    %p77 = por %p75, %p76
    %p78 = scmp.ne.s32.totalorder %s70, %s72
    %p79 = scmp.eq.s32.totalorder %s15, 3
    %p80 = por %p78, %p79
    %p81 = scmp.ne.s32.totalorder %s72, %s73
    %p82 = scmp.eq.s32.totalorder %s15, 0
    %p83 = por %p81, %p82
    %p84 = scmp.ne.s32.totalorder %s72, %s73
    %p85 = scmp.eq.s32.totalorder %s16, 3
    %p86 = por %p84, %p85
    %p88 = scmp.ne.s32.totalorder %s73, %s87
    %p89 = scmp.eq.s32.totalorder %s16, 0
    %p90 = por %p88, %p89
    %s91 = ssub.s32 %s10, %s17
    %p92 = scmp.eq.s32.totalorder %s91, 0
    %s94 = sadd.s32 %s93, 1
    %s95 = scalar_select %p92, %s93, %s94
    %p98 = pneg %p92
    %p99 = scmp.eq.s32.totalorder %s10, 3
    %p100 = por %p98, %p99
    %p101 = scmp.ne.s32.totalorder %s93, %s96
    %p102 = scmp.eq.s32.totalorder %s10, 0
    %p103 = por %p101, %p102
    %p104 = scmp.ne.s32.totalorder %s93, %s96
    %p105 = scmp.eq.s32.totalorder %s15, 3
    %p106 = por %p104, %p105
    %p107 = scmp.ne.s32.totalorder %s96, %s97
    %p108 = scmp.eq.s32.totalorder %s15, 0
    %p109 = por %p107, %p108
    %p110 = scmp.ne.s32.totalorder %s96, %s97
    %p111 = scmp.eq.s32.totalorder %s16, 3
    %p112 = por %p110, %p111
    %p114 = scmp.ne.s32.totalorder %s97, %s113
    %p115 = scmp.eq.s32.totalorder %s16, 0
    %p116 = por %p114, %p115
    %p117 = scmp.le.s32.totalorder 1, %s10
    %p118 = scmp.lt.s32.totalorder %s10, 5
    %p119 = pnand %p117, %p118
    %p120 = pneg %p119
    // Predicated region
    $region9: #{_step.4} parent=5 // pred_check
      _
    $region10: #{_step.4} parent=5 // pred_check_branch
      %122 = sbr.rel (%p119) target = $region12
    $region11: #{_step.4} parent=5 // pred_region
      %s123 = ssub.s32 %s10, 1
      // Predicated region
      $region13: #{_step.4} parent=11 // pred_check
        %p124 = pneg %p83
      $region14: #{_step.4} parent=11 // pred_check_branch
        %126 = sbr.rel (%p124) target = $region16
      $region15: #{_step.4} parent=11 // pred_region
        _
      $region16: #{_step.4} parent=11 // pred_fallthru
        _
    $region12: #{_step.4} parent=5 // pred_fallthru
      _
    %p127 = scmp.lt.s32.totalorder %s10, 4
    // Predicated region
    $region17: #{_step.4} parent=5 // pred_check
      %p128 = pneg %p127
    $region18: #{_step.4} parent=5 // pred_check_branch
      %130 = sbr.rel (%p128) target = $region20
    $region19: #{_step.4} parent=5 // pred_region
      // Predicated region
      $region21: #{_step.4} parent=19 // pred_check
        %p131 = pneg %p30
      $region22: #{_step.4} parent=19 // pred_check_branch
        %133 = sbr.rel (%p131) target = $region24
      $region23: #{_step.4} parent=19 // pred_region
        %s134 = smul.u32 2, %s10
        %p135 = scmp.lt.s32.totalorder %s134, 7
        %s136 = scalar_select %p135, %s134, 7
        %s137 = smul.addr %s136, 8
        %s138 = scalar_lea.vmem %s0, %s137
        %s139 = smul.u32 2, %s10
      $region24: #{_step.4} parent=19 // pred_fallthru
        _
      // Predicated region
      $region25: #{_step.4} parent=19 // pred_check
        %p140 = pneg %p56
      $region26: #{_step.4} parent=19 // pred_check_branch
        %142 = sbr.rel (%p140) target = $region28
      $region27: #{_step.4} parent=19 // pred_region
        %s143 = smul.u32 2, %s10
        %p144 = scmp.lt.s32.totalorder %s143, 7
        %s145 = scalar_select %p144, %s143, 7
        %s146 = smul.addr %s145, 8
        %s147 = scalar_lea.vmem %s1, %s146
        %s148 = smul.u32 2, %s10
      $region28: #{_step.4} parent=19 // pred_fallthru
        _
    $region20: #{_step.4} parent=5 // pred_fallthru
      _
    %p149 = scmp.le.s32.totalorder 1, %s10
    %p150 = scmp.lt.s32.totalorder %s10, 5
    %p151 = pnand %p149, %p150
    %p152 = pneg %p151
    // Predicated region
    $region29: #{_step.4} parent=5 // pred_check
      _
    $region30: #{_step.4} parent=5 // pred_check_branch
      %154 = sbr.rel (%p151) target = $region32
    $region31: #{_step.4} parent=5 // pred_region
      %s155 = ssub.s32 %s10, 1
      %s156 = smul.u32 2, %s15
      %p157 = scmp.lt.s32.totalorder %s156, 7
      %s158 = scalar_select %p157, %s156, 7
      %s159 = smul.addr %s158, 8
      %s160 = scalar_lea.vmem %s0, %s159
      %p161 = pneg %p36
      %p162 = pneg %p33
      %s163 = smul.u32 2, %s15
      %p164 = scmp.lt.s32.totalorder %s163, 7
      %s165 = scalar_select %p164, %s163, 7
      %s166 = smul.addr %s165, 8
      %s167 = scalar_lea.vmem %s1, %s166
      %p168 = pneg %p62
      %p169 = pneg %p59
      %p170 = pneg %p83
      %p171 = pneg %p80
      %p172 = pneg %p109
      %p173 = pneg %p106
      %s174 = smul.u32 2, %s15
      %p175 = scmp.lt.s32.totalorder %s174, 7
      %s176 = scalar_select %p175, %s174, 7
      %s177 = smul.addr %s176, 8
      %s178 = scalar_lea.vmem %s3, %s177
      %s179 = smul.u32 2, %s15
      %p180 = scmp.lt.s32.totalorder %s179, 7
      %s181 = scalar_select %p180, %s179, 7
      %s182 = smul.addr %s181, 8
      %s183 = scalar_lea.vmem %s0, %s182
      %s184 = smul.u32 2, %s15
      %s185 = smul.u32 2, %s15
      %p186 = scmp.lt.s32.totalorder %s185, 7
      %s187 = scalar_select %p186, %s185, 7
      %s188 = smul.addr %s187, 8
      %s189 = scalar_lea.vmem %s1, %s188
      %s190 = smul.u32 2, %s15
      %s191 = smul.u32 2, %s15
      %p192 = scmp.lt.s32.totalorder %s191, 7
      %s193 = scalar_select %p192, %s191, 7
      %s194 = smul.addr %s193, 8
      %s195 = scalar_lea.vmem %s3, %s194
      %s196 = smul.u32 2, %s15
      %s197 = sld [smem:[#allocation2]]
      %v198 = vld [vmem:[%s183] sm:$0xff]
      %v199 = vld [vmem:[%s183 + $0x8] sm:$0xff]
      %v200 = vld [vmem:[%s189] sm:$0xff]
      %v201 = vld [vmem:[%s189 + $0x8] sm:$0xff]
      %v202 = vsub.f32 %v198, %v200
      %v203 = vsub.f32 %v199, %v201
      %v204 = vstv %s197
      %v205 = vmul.f32 %v204, %v202
      %v206 = vmul.f32 %v204, %v203
      %v207 = vsub.f32 %v198, %v205
      %v208 = vsub.f32 %v199, %v206
      %209 = vst [vmem:[%s195] sm:$0xff] %v207
      %210 = vst [vmem:[%s195 + $0x8] sm:$0xff] %v208
      %s211 = smul.u32 2, %s15
      %p212 = scmp.lt.s32.totalorder %s211, 7
      %s213 = scalar_select %p212, %s211, 7
      %s214 = smul.addr %s213, 8
      %s215 = scalar_lea.vmem %s3, %s214
      // Predicated region
      $region33: #{_step.4} parent=31 // pred_check
        %p216 = pneg %p106
      $region34: #{_step.4} parent=31 // pred_check_branch
        %218 = sbr.rel (%p216) target = $region36
      $region35: #{_step.4} parent=31 // pred_region
        %s219 = smul.u32 2, %s15
      $region36: #{_step.4} parent=31 // pred_fallthru
        _
    $region32: #{_step.4} parent=5 // pred_fallthru
      _
    %p220 = scmp.le.s32.totalorder 2, %s10
    // Predicated region
    $region37: #{_step.4} parent=5 // pred_check
      %p221 = pneg %p220
    $region38: #{_step.4} parent=5 // pred_check_branch
      %223 = sbr.rel (%p221) target = $region40
    $region39: #{_step.4} parent=5 // pred_region
      %s224 = ssub.s32 %s10, 2
      // Predicated region
      $region41: #{_step.4} parent=39 // pred_check
        %p225 = pneg %p112
      $region42: #{_step.4} parent=39 // pred_check_branch
        %227 = sbr.rel (%p225) target = $region44
      $region43: #{_step.4} parent=39 // pred_region
        %s228 = smul.u32 2, %s16
        %p229 = scmp.lt.s32.totalorder %s228, 7
        %s230 = scalar_select %p229, %s228, 7
        %s231 = smul.addr %s230, 8
        %s232 = scalar_lea.vmem %s3, %s231
      $region44: #{_step.4} parent=39 // pred_fallthru
        _
    $region40: #{_step.4} parent=5 // pred_fallthru
      _
  $region6: #{_step.4} parent=0 // loop_footer
    %s14 = sadd.s32 1, %s10
  $region7: #{_step.4} parent=0 // loop_footer_branch
    %9 = sbr.rel target = $region3
  $region8: #{_step.4} parent=0 // loop_exit
    _

// kernel: _step.5
$region0: #{_step.5}
  #allocation0 [shape = 'u32[]', space=smem, size = 0x4, offset = 0x4, fixed_abs, tag = 'smem constant byte address 0x4 - core index']
  #allocation1 [shape = 'u32[144,128]{1,0:T(1,128)}', space=vmem, size = 0x12000, scoped, tag = 'internal scratch']
  #allocation2 [shape = 'f32[1]{0:T(128)S(6)}', space=smem, size = 0x200, scoped, tag = 'scoped memory for _step.5']
  %s0 = inlined_call_operand.vmem [shape: f32[16,128], index: 0, kind: input, shape index: {}, may-alias: {0,3}]
  %s1 = inlined_call_operand.vmem [shape: bf16[16,128], index: 1, kind: input, shape index: {}]
  %s2 = inlined_call_operand.<no memory space> [shape: f32[1], index: 2, kind: input, shape index: {}]
  %s3 = inlined_call_operand.vmem [shape: f32[16,128], index: 3, kind: output, shape index: {}, may-alias: {0,3}]
  %s4 = sld [smem:[#allocation0]]
  $region45: #{_step.5} parent=0
    _
  %s6 = ssub.s32 1, %s4
  %s7 = scalar_select 0, %s6, %s4
  %8 = sst [smem:[#allocation2]] %s2
  loop: start=0, step=1, limit=4
  $region2: #{_step.5} parent=0 // loop_pre_header
    _
  $region3: #{_step.5} parent=0 // loop_header
    %s10 = sphi 0, %s14
    %p11 = scmp.ge.s32.totalorder %s10, 4
    %s20 = sphi 0, %s22
    %s23 = sphi 0, %s20
    %s24 = sphi 0, %s23
    %s40 = sphi 0, %s24
    %s46 = sphi 0, %s48
    %s49 = sphi 0, %s46
    %s50 = sphi 0, %s49
    %s66 = sphi 0, %s50
    %s70 = sphi 0, %s70
    %s72 = sphi 0, %s70
    %s73 = sphi 0, %s72
    %s87 = sphi 0, %s73
    %s93 = sphi 0, %s95
    %s96 = sphi 0, %s93
    %s97 = sphi 0, %s96
    %s113 = sphi 0, %s97
  $region4: #{_step.5} parent=0 // loop_header_branch
    %13 = sbr.rel (%p11) target = $region8
  $region5: #{_step.5} parent=0 // loop_body
    %s15 = ssub.s32 %s10, 1
    %s16 = ssub.s32 %s10, 2
    %s17 = sadd.s32 %s10, 1
    %s18 = ssub.s32 %s10, %s17
    %p19 = scmp.eq.s32.totalorder %s18, 0
    %s21 = sadd.s32 %s20, 1
    %s22 = scalar_select %p19, %s20, %s21
    %p25 = pneg %p19
    %p26 = scmp.eq.s32.totalorder %s10, 1
    %p27 = por %p25, %p26
    %p28 = scmp.ne.s32.totalorder %s20, %s23
    %p29 = scmp.eq.s32.totalorder %s10, 0
    %p30 = por %p28, %p29
    %p31 = scmp.ne.s32.totalorder %s20, %s23
    %p32 = scmp.eq.s32.totalorder %s15, 1
    %p33 = por %p31, %p32
    %p34 = scmp.ne.s32.totalorder %s23, %s24
    %p35 = scmp.eq.s32.totalorder %s15, 0
    %p36 = por %p34, %p35
    %p37 = scmp.ne.s32.totalorder %s23, %s24
    %p38 = scmp.eq.s32.totalorder %s16, 1
    %p39 = por %p37, %p38
    %p41 = scmp.ne.s32.totalorder %s24, %s40
    %p42 = scmp.eq.s32.totalorder %s16, 0
    %p43 = por %p41, %p42
    %s44 = ssub.s32 %s10, %s17
    %p45 = scmp.eq.s32.totalorder %s44, 0
    %s47 = sadd.s32 %s46, 1
    %s48 = scalar_select %p45, %s46, %s47
    %p51 = pneg %p45
    %p52 = scmp.eq.s32.totalorder %s10, 1
    %p53 = por %p51, %p52
    %p54 = scmp.ne.s32.totalorder %s46, %s49
    %p55 = scmp.eq.s32.totalorder %s10, 0
    %p56 = por %p54, %p55
    %p57 = scmp.ne.s32.totalorder %s46, %s49
    %p58 = scmp.eq.s32.totalorder %s15, 1
    %p59 = por %p57, %p58
    %p60 = scmp.ne.s32.totalorder %s49, %s50
    %p61 = scmp.eq.s32.totalorder %s15, 0
    %p62 = por %p60, %p61
    %p63 = scmp.ne.s32.totalorder %s49, %s50
    %p64 = scmp.eq.s32.totalorder %s16, 1
    %p65 = por %p63, %p64
    %p67 = scmp.ne.s32.totalorder %s50, %s66
    %p68 = scmp.eq.s32.totalorder %s16, 0
    %p69 = por %p67, %p68
    %s71 = sadd.s32 %s70, 1
    %p74 = scmp.eq.s32.totalorder %s10, 1
    %p75 = scmp.ne.s32.totalorder %s70, %s72
    %p76 = scmp.eq.s32.totalorder %s10, 0
    %p77 = por %p75, %p76
    %p78 = scmp.ne.s32.totalorder %s70, %s72
    %p79 = scmp.eq.s32.totalorder %s15, 1
    %p80 = por %p78, %p79
    %p81 = scmp.ne.s32.totalorder %s72, %s73
    %p82 = scmp.eq.s32.totalorder %s15, 0
    %p83 = por %p81, %p82
    %p84 = scmp.ne.s32.totalorder %s72, %s73
    %p85 = scmp.eq.s32.totalorder %s16, 1
    %p86 = por %p84, %p85
    %p88 = scmp.ne.s32.totalorder %s73, %s87
    %p89 = scmp.eq.s32.totalorder %s16, 0
    %p90 = por %p88, %p89
    %s91 = ssub.s32 %s10, %s17
    %p92 = scmp.eq.s32.totalorder %s91, 0
    %s94 = sadd.s32 %s93, 1
    %s95 = scalar_select %p92, %s93, %s94
    %p98 = pneg %p92
    %p99 = scmp.eq.s32.totalorder %s10, 1
    %p100 = por %p98, %p99
    %p101 = scmp.ne.s32.totalorder %s93, %s96
    %p102 = scmp.eq.s32.totalorder %s10, 0
    %p103 = por %p101, %p102
    %p104 = scmp.ne.s32.totalorder %s93, %s96
    %p105 = scmp.eq.s32.totalorder %s15, 1
    %p106 = por %p104, %p105
    %p107 = scmp.ne.s32.totalorder %s96, %s97
    %p108 = scmp.eq.s32.totalorder %s15, 0
    %p109 = por %p107, %p108
    %p110 = scmp.ne.s32.totalorder %s96, %s97
    %p111 = scmp.eq.s32.totalorder %s16, 1
    %p112 = por %p110, %p111
    %p114 = scmp.ne.s32.totalorder %s97, %s113
    %p115 = scmp.eq.s32.totalorder %s16, 0
    %p116 = por %p114, %p115
    %p117 = scmp.le.s32.totalorder 1, %s10
    %p118 = scmp.lt.s32.totalorder %s10, 3
    %p119 = pnand %p117, %p118
    %p120 = pneg %p119
    // Predicated region
    $region9: #{_step.5} parent=5 // pred_check
      _
    $region10: #{_step.5} parent=5 // pred_check_branch
      %122 = sbr.rel (%p119) target = $region12
    $region11: #{_step.5} parent=5 // pred_region
      %s123 = ssub.s32 %s10, 1
      // Predicated region
      $region13: #{_step.5} parent=11 // pred_check
        %p124 = pneg %p83
      $region14: #{_step.5} parent=11 // pred_check_branch
        %126 = sbr.rel (%p124) target = $region16
      $region15: #{_step.5} parent=11 // pred_region
        _
      $region16: #{_step.5} parent=11 // pred_fallthru
        _
    $region12: #{_step.5} parent=5 // pred_fallthru
      _
    %p127 = scmp.lt.s32.totalorder %s10, 2
    // Predicated region
    $region17: #{_step.5} parent=5 // pred_check
      %p128 = pneg %p127
    $region18: #{_step.5} parent=5 // pred_check_branch
      %130 = sbr.rel (%p128) target = $region20
    $region19: #{_step.5} parent=5 // pred_region
      // Predicated region
      $region21: #{_step.5} parent=19 // pred_check
        %p131 = pneg %p30
      $region22: #{_step.5} parent=19 // pred_check_branch
        %133 = sbr.rel (%p131) target = $region24
      $region23: #{_step.5} parent=19 // pred_region
        %p134 = scmp.lt.s32.totalorder %s10, 1
        %s135 = scalar_select %p134, %s10, 1
        %s136 = smul.addr %s135, 8
        %s137 = scalar_lea.vmem %s0, %s136
      $region24: #{_step.5} parent=19 // pred_fallthru
        _
      // Predicated region
      $region25: #{_step.5} parent=19 // pred_check
        %p138 = pneg %p56
      $region26: #{_step.5} parent=19 // pred_check_branch
        %140 = sbr.rel (%p138) target = $region28
      $region27: #{_step.5} parent=19 // pred_region
        %p141 = scmp.lt.s32.totalorder %s10, 1
        %s142 = scalar_select %p141, %s10, 1
        %s143 = smul.addr %s142, 4
        %s144 = scalar_lea.vmem %s1, %s143
      $region28: #{_step.5} parent=19 // pred_fallthru
        _
    $region20: #{_step.5} parent=5 // pred_fallthru
      _
    %p145 = scmp.le.s32.totalorder 1, %s10
    %p146 = scmp.lt.s32.totalorder %s10, 3
    %p147 = pnand %p145, %p146
    %p148 = pneg %p147
    // Predicated region
    $region29: #{_step.5} parent=5 // pred_check
      _
    $region30: #{_step.5} parent=5 // pred_check_branch
      %150 = sbr.rel (%p147) target = $region32
    $region31: #{_step.5} parent=5 // pred_region
      %s151 = ssub.s32 %s10, 1
      %p152 = scmp.lt.s32.totalorder %s15, 1
      %s153 = scalar_select %p152, %s15, 1
      %s154 = smul.addr %s153, 8
      %s155 = scalar_lea.vmem %s0, %s154
      %p156 = pneg %p36
      %p157 = pneg %p33
      %p158 = scmp.lt.s32.totalorder %s15, 1
      %s159 = scalar_select %p158, %s15, 1
      %s160 = smul.addr %s159, 4
      %s161 = scalar_lea.vmem %s1, %s160
      %p162 = pneg %p62
      %p163 = pneg %p59
      %p164 = pneg %p83
      %p165 = pneg %p80
      %p166 = pneg %p109
      %p167 = pneg %p106
      %p168 = scmp.lt.s32.totalorder %s15, 1
      %s169 = scalar_select %p168, %s15, 1
      %s170 = smul.addr %s169, 8
      %s171 = scalar_lea.vmem %s3, %s170
      %p172 = scmp.lt.s32.totalorder %s15, 1
      %s173 = scalar_select %p172, %s15, 1
      %s174 = smul.addr %s173, 8
      %s175 = scalar_lea.vmem %s0, %s174
      %p176 = scmp.lt.s32.totalorder %s15, 1
      %s177 = scalar_select %p176, %s15, 1
      %s178 = smul.addr %s177, 4
      %s179 = scalar_lea.vmem %s1, %s178
      %p180 = scmp.lt.s32.totalorder %s15, 1
      %s181 = scalar_select %p180, %s15, 1
      %s182 = smul.addr %s181, 8
      %s183 = scalar_lea.vmem %s3, %s182
      %s184 = sld [smem:[#allocation2]]
      %v185 = vld [vmem:[%s175] sm:$0xff]
      %v186 = vld [vmem:[%s179] sm:$0xf]
      %v187 = vunpack.c.l.bf16 %v186
      %v188 = vsub.f32 %v185, %v187
      %v189 = vstv %s184
      %v190 = vmul.f32 %v189, %v188
      %v191 = vsub.f32 %v185, %v190
      %192 = vst [vmem:[%s183] sm:$0xff] %v191
      %p193 = scmp.lt.s32.totalorder %s15, 1
      %s194 = scalar_select %p193, %s15, 1
      %s195 = smul.addr %s194, 8
      %s196 = scalar_lea.vmem %s3, %s195
      // Predicated region
      $region33: #{_step.5} parent=31 // pred_check
        %p197 = pneg %p106
      $region34: #{_step.5} parent=31 // pred_check_branch
        %199 = sbr.rel (%p197) target = $region36
      $region35: #{_step.5} parent=31 // pred_region
        _
      $region36: #{_step.5} parent=31 // pred_fallthru
        _
    $region32: #{_step.5} parent=5 // pred_fallthru
      _
    %p200 = scmp.le.s32.totalorder 2, %s10
    // Predicated region
    $region37: #{_step.5} parent=5 // pred_check
      %p201 = pneg %p200
    $region38: #{_step.5} parent=5 // pred_check_branch
      %203 = sbr.rel (%p201) target = $region40
    $region39: #{_step.5} parent=5 // pred_region
      %s204 = ssub.s32 %s10, 2
      // Predicated region
      $region41: #{_step.5} parent=39 // pred_check
        %p205 = pneg %p112
      $region42: #{_step.5} parent=39 // pred_check_branch
        %207 = sbr.rel (%p205) target = $region44
      $region43: #{_step.5} parent=39 // pred_region
        %p208 = scmp.lt.s32.totalorder %s16, 1
        %s209 = scalar_select %p208, %s16, 1
        %s210 = smul.addr %s209, 8
        %s211 = scalar_lea.vmem %s3, %s210
      $region44: #{_step.5} parent=39 // pred_fallthru
        _
    $region40: #{_step.5} parent=5 // pred_fallthru
      _
  $region6: #{_step.5} parent=0 // loop_footer
    %s14 = sadd.s32 1, %s10
  $region7: #{_step.5} parent=0 // loop_footer_branch
    %9 = sbr.rel target = $region3
  $region8: #{_step.5} parent=0 // loop_exit
    _

// kernel: _step.6
$region0: #{_step.6}
  #allocation0 [shape = 'u32[]', space=smem, size = 0x4, offset = 0x4, fixed_abs, tag = 'smem constant byte address 0x4 - core index']
  #allocation1 [shape = 'u32[144,128]{1,0:T(1,128)}', space=vmem, size = 0x12000, scoped, tag = 'internal scratch']
  #allocation2 [shape = 'f32[1]{0:T(128)S(6)}', space=smem, size = 0x200, scoped, tag = 'scoped memory for _step.6']
  %s0 = inlined_call_operand.vmem [shape: f32[8,128], index: 0, kind: input, shape index: {}, may-alias: {0,3}]
  %s1 = inlined_call_operand.vmem [shape: f32[8,128], index: 1, kind: input, shape index: {}]
  %s2 = inlined_call_operand.<no memory space> [shape: f32[1], index: 2, kind: input, shape index: {}]
  %s3 = inlined_call_operand.vmem [shape: f32[8,128], index: 3, kind: output, shape index: {}, may-alias: {0,3}]
  %s4 = sld [smem:[#allocation0]]
  $region22: #{_step.6} parent=0
    _
  %s6 = ssub.s32 1, %s4
  %s7 = scalar_select 0, %s6, %s4
  %8 = sst [smem:[#allocation2]] %s2
  // Predicated region
  $region2: #{_step.6} parent=0 // pred_check
    _
  $region3: #{_step.6} parent=0 // pred_check_branch
    %10 = sbr.rel (0) target = $region5
  $region4: #{_step.6} parent=0 // pred_region
    _
  $region5: #{_step.6} parent=0 // pred_fallthru
    _
  // Predicated region
  $region6: #{_step.6} parent=0 // pred_check
    _
  $region7: #{_step.6} parent=0 // pred_check_branch
    %12 = sbr.rel (0) target = $region9
  $region8: #{_step.6} parent=0 // pred_region
    _
  $region9: #{_step.6} parent=0 // pred_fallthru
    _
  // Predicated region
  $region10: #{_step.6} parent=0 // pred_check
    _
  $region11: #{_step.6} parent=0 // pred_check_branch
    %14 = sbr.rel (0) target = $region13
  $region12: #{_step.6} parent=0 // pred_region
    _
  $region13: #{_step.6} parent=0 // pred_fallthru
    _
  %s15 = sld [smem:[#allocation2]]
  %v16 = vld [vmem:[%s0] sm:$0xff]
  %v17 = vld [vmem:[%s1] sm:$0xff]
  %v18 = vsub.f32 %v16, %v17
  %v19 = vstv %s15
  %v20 = vmul.f32 %v19, %v18
  %v21 = vsub.f32 %v16, %v20
  %22 = vst [vmem:[%s3] sm:$0xff] %v21
  // Predicated region
  $region14: #{_step.6} parent=0 // pred_check
    _
  $region15: #{_step.6} parent=0 // pred_check_branch
    %24 = sbr.rel (0) target = $region17
  $region16: #{_step.6} parent=0 // pred_region
    _
  $region17: #{_step.6} parent=0 // pred_fallthru
    _
  // Predicated region
  $region18: #{_step.6} parent=0 // pred_check
    _
  $region19: #{_step.6} parent=0 // pred_check_branch
    %26 = sbr.rel (0) target = $region21
  $region20: #{_step.6} parent=0 // pred_region
    _
  $region21: #{_step.6} parent=0 // pred_fallthru
    _

</llo_original>
